<compile_context>
chip_gen: v7x
topology: tpu7x:2x2x1
jax: 0.10.0
libtpu: 0.0.40
codegen_flags: <defaults>
</compile_context>

<pallas_src>
import functools
import math

import jax
import jax.numpy as jnp
from jax.experimental import pallas as pl
from jax.experimental.pallas import tpu as pltpu


def _rmsnorm_kernel(x_ref, gamma_ref, o_ref, *, eps, inv_dim):
    # x_ref:     (TR, PD) row tile (feature axis zero-padded to PD >= true dim)
    # gamma_ref: (1, PD)  broadcast scale (same block every grid step)
    x = x_ref[...].astype(jnp.float32)
    # zero-padded feature columns contribute nothing to the sum of squares,
    # so sum(x*x) * (1/true_dim) equals the mean over the real features.
    ms = jnp.sum(x * x, axis=-1, keepdims=True) * inv_dim
    inv = jax.lax.rsqrt(ms + eps)
    g = gamma_ref[...].astype(jnp.float32)       # (1, PD) broadcasts over rows
    o_ref[...] = (x * inv * g).astype(o_ref.dtype)


_TILE_TARGET_BYTES = 4 << 20     # ~4 MiB input tile: HBM-roofline plateau


def _round_down(v, m):
    return max(m, (v // m) * m)


def _round_up(v, m):
    return ((v + m - 1) // m) * m


def _vmem_limit_bytes():
    """Scoped VMEM limit: half of physical VMEM, clamped to [16, 48] MiB."""
    try:
        cap = pltpu.get_tpu_info().vmem_capacity_bytes
    except Exception:
        cap = 64 << 20                           # conservative (v7x per-TC size)
    return int(min(48 << 20, max(16 << 20, cap // 2)))


def _tensorcores_per_chip():
    """2 on v7x (megacore grid sharding), 1 otherwise / if unknown."""
    try:
        kind = jax.devices()[0].device_kind.lower()
        if "v7" in kind or "7x" in kind:
            return 2
    except Exception:
        pass
    return 1


def _pick_row_tile(rows, dim, itemsize, vmem_budget_bytes, cores):
    # sublane packing: f32 -> 8, bf16 -> 16, int8/fp8 -> 32
    pack = max(8, 32 // max(1, itemsize))
    # per-row VMEM: 2 pipeline buffers x (input + output) tile at the input
    # dtype, plus ~2 f32 temporaries for the live tile (x.astype(f32), x*inv*g).
    bytes_per_row = 4 * dim * itemsize + 8 * dim
    tr_cap = max(pack, vmem_budget_bytes // bytes_per_row)
    # byte-based target: each input tile buffer ~_TILE_TARGET_BYTES
    tr = max(pack, _TILE_TARGET_BYTES // (dim * itemsize))
    tr = min(tr, tr_cap)
    tr = min(tr, _round_up(rows, pack))          # don't over-size tiny inputs
    tr = _round_down(tr, pack)

    # v7x only: keep the 1-D parallel grid balanced across the 2 TensorCores.
    if cores >= 2 and rows >= cores * pack:
        nb = pl.cdiv(rows, tr)
        if nb % cores != 0 or nb < cores:
            nb_target = _round_up(max(nb, cores), cores)
            tr_bal = _round_up(pl.cdiv(rows, nb_target), pack)
            if pl.cdiv(rows, tr_bal) % cores == 0:
                tr = tr_bal
    return tr


def rmsnorm(x, gamma, eps=1e-6):
    """RMSNorm over the last axis of x, matching the PyTorch reference."""
    orig_shape = x.shape
    dim = orig_shape[-1]
    assert gamma.shape == (dim,)

    rows = math.prod(orig_shape[:-1])            # empty -> 1 (1-D input)
    x2 = x.reshape(rows, dim)
    gamma2 = gamma.reshape(1, dim)

    # Lane-dense feature axis: pad D to a multiple of 128 so output stores are
    # unmasked vst; padded zero columns don't affect the norm and are sliced off.
    pdim = _round_up(dim, 128)
    if pdim != dim:
        x2 = jnp.pad(x2, ((0, 0), (0, pdim - dim)))
        gamma2 = jnp.pad(gamma2, ((0, 0), (0, pdim - dim)))

    itemsize = jnp.dtype(x2.dtype).itemsize
    vmem_limit = _vmem_limit_bytes()
    cores = _tensorcores_per_chip()
    tr = _pick_row_tile(rows, pdim, itemsize, vmem_limit // 2, cores)
    num_blocks = pl.cdiv(rows, tr)               # last block may be partial

    kernel = functools.partial(_rmsnorm_kernel, eps=float(eps), inv_dim=1.0 / dim)

    out = pl.pallas_call(
        kernel,
        out_shape=jax.ShapeDtypeStruct((rows, pdim), x.dtype),
        grid=(num_blocks,),
        in_specs=[
            pl.BlockSpec((tr, pdim), lambda i: (i, 0)),   # x row tile
            pl.BlockSpec((1, pdim), lambda i: (0, 0)),    # gamma (same block)
        ],
        out_specs=pl.BlockSpec((tr, pdim), lambda i: (i, 0)),
        compiler_params=pltpu.CompilerParams(
            dimension_semantics=("parallel",),
            vmem_limit_bytes=vmem_limit,
        ),
    )(x2, gamma2)

    if pdim != dim:
        out = out[:, :dim]
    return out.reshape(orig_shape)


def rmsnorm_ref(x, gamma, eps=1e-6):
    xf = x.astype(jnp.float32)
    ms = jnp.mean(xf * xf, axis=-1, keepdims=True)
    return (xf / jnp.sqrt(ms + eps) * gamma.astype(jnp.float32)).astype(x.dtype)


if __name__ == "__main__":
    key = jax.random.PRNGKey(0)
    batch, seq, hidden = 2, 8, 32

    x = jax.random.normal(key, (batch, seq, hidden), dtype=jnp.float32)
    # deterministic parameter init: gamma = ones(dim), as in nn.Parameter(torch.ones(dim))
    gamma = jnp.ones((hidden,), dtype=jnp.float32)

    out = rmsnorm(x, gamma, eps=1e-6)
    out = jax.block_until_ready(out)

    ref = rmsnorm_ref(x, gamma, eps=1e-6)
    assert out.shape == x.shape
    assert jnp.allclose(out, ref, atol=1e-5, rtol=1e-5), "mismatch vs reference"

    print("KERNEL_OK")
</pallas_src>

<mosaic_0001>
module attributes {stable_mosaic.version = 11 : i64} {
  func.func @_rmsnorm_kernel(%arg0: i32, %arg1: memref<16x128xf32, #tpu.memory_space<vmem>>, %arg2: memref<1x128xf32, #tpu.memory_space<vmem>>, %arg3: memref<16x128xf32, #tpu.memory_space<vmem>>) attributes {dimension_semantics = [#tpu.dimension_semantics<parallel>], iteration_bounds = array<i64: 1>, scalar_prefetch = 0 : i64, scratch_operands = 0 : i64, tpu.core_type = #tpu.core_type<tc>, window_params = [{transform_indices = @transform_0, window_bounds = array<i64: 16, 128>}, {pipeline_mode = #tpu.pipeline_mode<synchronous>, transform_indices = @transform_1, window_bounds = array<i64: 1, 128>}, {transform_indices = @transform_2, window_bounds = array<i64: 16, 128>}]} {
    %c0 = arith.constant 0 : index
    %c0_0 = arith.constant 0 : index
    %0 = vector.load %arg1[%c0, %c0_0] : memref<16x128xf32, #tpu.memory_space<vmem>>, vector<16x128xf32>
    %1 = arith.mulf %0, %0 : vector<16x128xf32>
    %cst = arith.constant dense<0.000000e+00> : vector<16xf32>
    %2 = vector.multi_reduction <add>, %1, %cst [1] : vector<16x128xf32> to vector<16xf32>
    %3 = vector.shape_cast %2 : vector<16xf32> to vector<16x1xf32>
    %cst_1 = arith.constant 3.125000e-02 : f32
    %4 = vector.broadcast %cst_1 : f32 to vector<16x1xf32>
    %5 = arith.mulf %3, %4 : vector<16x1xf32>
    %cst_2 = arith.constant 9.99999997E-7 : f32
    %6 = vector.broadcast %cst_2 : f32 to vector<16x1xf32>
    %7 = arith.addf %5, %6 : vector<16x1xf32>
    %8 = math.rsqrt %7 : vector<16x1xf32>
    %c0_3 = arith.constant 0 : index
    %c0_4 = arith.constant 0 : index
    %9 = vector.load %arg2[%c0_3, %c0_4] : memref<1x128xf32, #tpu.memory_space<vmem>>, vector<1x128xf32>
    %10 = vector.broadcast %8 : vector<16x1xf32> to vector<16x128xf32>
    %11 = arith.mulf %0, %10 : vector<16x128xf32>
    %12 = vector.broadcast %9 : vector<1x128xf32> to vector<16x128xf32>
    %13 = arith.mulf %11, %12 : vector<16x128xf32>
    %c0_5 = arith.constant 0 : index
    %c0_6 = arith.constant 0 : index
    %14 = vector.load %arg3[%c0_5, %c0_6] : memref<16x128xf32, #tpu.memory_space<vmem>>, vector<16x128xf32>
    tpu.vector_store %arg3[%c0_5, %c0_6], %13 {strides = array<i32>} : memref<16x128xf32, #tpu.memory_space<vmem>>, vector<16x128xf32>,
    return
  }
  func.func @transform_0(%arg0: i32) -> (i32, i32) {
    %c0_i32 = arith.constant 0 : i32
    %c0_i32_0 = arith.constant 0 : i32
    return %arg0, %c0_i32 : i32, i32
  }
  func.func @transform_1(%arg0: i32) -> (i32, i32) {
    %c0_i32 = arith.constant 0 : i32
    %c0_i32_0 = arith.constant 0 : i32
    %c0_i32_1 = arith.constant 0 : i32
    return %c0_i32, %c0_i32_0 : i32, i32
  }
  func.func @transform_2(%arg0: i32) -> (i32, i32) {
    %c0_i32 = arith.constant 0 : i32
    %c0_i32_0 = arith.constant 0 : i32
    return %arg0, %c0_i32 : i32, i32
  }
}

</mosaic_0001>

<llo_original>
// kernel: tpu_custom_call.1
$region0: #{tpu_custom_call.1}
  #allocation0 [shape = 'u32[]', space=smem, size = 0x4, offset = 0x4, fixed_abs, tag = 'smem constant byte address 0x4 - core index']
  #allocation1 [shape = 'u32[144,128]{1,0:T(1,128)}', space=vmem, size = 0x12000, scoped, tag = 'internal scratch']
  %s0 = inlined_call_operand.hbm [shape: f32[16,128], index: 0, kind: input, shape index: {}]
  %s1 = inlined_call_operand.vmem [shape: f32[1,128], index: 1, kind: input, shape index: {}]
  %s2 = inlined_call_operand.hbm [shape: f32[16,128], index: 2, kind: output, shape index: {}]
  %s3 = sld [smem:[#allocation0]]
  $region22: #{tpu_custom_call.1} parent=0
    _
  %s5 = ssub.s32 1, %s3
  %s6 = scalar_select 0, %s5, %s3
  $region1: #{tpu_custom_call.1} parent=0
    #allocation2 [shape = 'u8[8192]{0}', space=vmem, size = 0x2000, scoped, tag = 'input window, operand 0, single buffered']
    #allocation3 [shape = 's32[1]{0}', space=sflag, size = 0x4, scoped, tag = 'scoped memory for tpu_custom_call.1']
    #allocation4 [shape = 's32[1]{0}', space=sflag, size = 0x4, scoped, tag = 'scoped memory for tpu_custom_call.1']
    #allocation5 [shape = 'u8[8192]{0}', space=vmem, size = 0x2000, scoped, tag = 'output window, operand 0, single buffered']
    %7 = vsyncpa [#allocation3], 0
    %8 = vsyncpa [#allocation4], 0
    // Predicated region
    $region2: #{tpu_custom_call.1} parent=1 // pred_check
      _
    $region3: #{tpu_custom_call.1} parent=1 // pred_check_branch
      %10 = sbr.rel (0) target = $region5
    $region4: #{tpu_custom_call.1} parent=1 // pred_region
      %s12 = ssub.s32 256, 256
      %13 = vsyncadd [#allocation3], %s12
      %s14 = sshll.u32 [#allocation2], 4
      %s15 = int_to_ptr.vmem [resolvable:$true] %s14
      %20 = dma.hbm_to_vmem [thread:$0]  %s0, 256, %s15, [#allocation3], 128, 128, 8
    $region5: #{tpu_custom_call.1} parent=1 // pred_fallthru
      _
    // Predicated region
    $region6: #{tpu_custom_call.1} parent=1 // pred_check
      _
    $region7: #{tpu_custom_call.1} parent=1 // pred_check_branch
      %22 = sbr.rel (0) target = $region9
    $region8: #{tpu_custom_call.1} parent=1 // pred_region
      _
    $region9: #{tpu_custom_call.1} parent=1 // pred_fallthru
      _
    // Predicated region
    $region10: #{tpu_custom_call.1} parent=1 // pred_check
      _
    $region11: #{tpu_custom_call.1} parent=1 // pred_check_branch
      %24 = sbr.rel (0) target = $region13
    $region12: #{tpu_custom_call.1} parent=1 // pred_region
      %25 = dma.done [#allocation3], 256
    $region13: #{tpu_custom_call.1} parent=1 // pred_fallthru
      _
    %v26 = vld [vmem:[#allocation2] sm:$0xff]
    %v27 = vld [vmem:[#allocation2 + $0x8] sm:$0xff]
    %v28 = vmul.f32 %v26, %v26
    %v29 = vmul.f32 %v27, %v27
    %30 = vadd.xlane.f32.xlu0 %v28
    %v31 = vpop.xlane.xlu0 %30
    %32 = vadd.xlane.f32.xlu0 %v29
    %v33 = vpop.xlane.xlu0 %32
    %v34 = vmul.f32 %v31, 0.03125
    %v35 = vmul.f32 %v33, 0.03125
    %v36 = vadd.f32 %v34, 1e-06
    %v37 = vadd.f32 %v35, 1e-06
    %v38 = vrsqrt.pop %v36
    %v39 = vrsqrt.pop %v37
    %v40 = vld [vmem:[%s1] sm:$0x1]
    %v41 = vmul.f32 %v26, %v38
    %v42 = vmul.f32 %v27, %v39
    %v44 = vlaneseq
    %v45 = vshrl.u32 %v44, 7
    %v46 = vsub.s32 0, %v45
    %v47 = vrot.slane %v40, %v46
    %v49 = vmul.f32 %v41, %v47
    %v50 = vmul.f32 %v42, %v47
    %51 = vst [vmem:[#allocation5] sm:$0xff] %v49
    %52 = vst [vmem:[#allocation5 + $0x8] sm:$0xff] %v50
    // Predicated region
    $region14: #{tpu_custom_call.1} parent=1 // pred_check
      _
    $region15: #{tpu_custom_call.1} parent=1 // pred_check_branch
      %54 = sbr.rel (0) target = $region17
    $region16: #{tpu_custom_call.1} parent=1 // pred_region
      %s56 = ssub.s32 256, 256
      %57 = vsyncadd [#allocation4], %s56
      %s58 = sshll.u32 [#allocation5], 4
      %s59 = int_to_ptr.vmem [resolvable:$true] %s58
      %64 = dma.vmem_to_hbm [thread:$0]  %s59, 256, %s2, [#allocation4], 128, 128, 8
    $region17: #{tpu_custom_call.1} parent=1 // pred_fallthru
      _
    // Predicated region
    $region18: #{tpu_custom_call.1} parent=1 // pred_check
      _
    $region19: #{tpu_custom_call.1} parent=1 // pred_check_branch
      %66 = sbr.rel (0) target = $region21
    $region20: #{tpu_custom_call.1} parent=1 // pred_region
      %67 = dma.done [#allocation4], 256
    $region21: #{tpu_custom_call.1} parent=1 // pred_fallthru
      _
    %68 = vsyncpa [#allocation3], 1
    %69 = vsyncpa [#allocation4], 1

</llo_original>
